<compile_context>
chip_gen: v5e
topology: v5e:2x2
jax: 0.10.0
libtpu: 0.0.40
codegen_flags: <defaults>
</compile_context>

<pallas_src>
import math

import jax
import jax.numpy as jnp
from jax.experimental import pallas as pl
from jax.experimental.pallas import tpu as pltpu

HIDDEN = 32   # width of both hidden layers
LANES = 128   # TPU lane width; batch lives on the lane axis


def _round_up(x, m):
    return ((x + m - 1) // m) * m


def _choose_block(batch, max_block_b):
    """Pick the lane-axis (batch) block size and padded batch.

    - Block is a multiple of 128 lanes and as large as possible (amortizes the
      ~0.35 us per-grid-step pipeline overhead).
    - When the batch is large enough, force >= 2 grid steps so the "parallel"
      grid axis can be sharded across both v7x TensorCores.
    """
    b_al = _round_up(max(batch, 1), LANES)
    n_blocks = -(-b_al // max_block_b)          # ceil div
    if n_blocks == 1 and b_al >= 2 * 1024:      # enough work to share across 2 TCs
        n_blocks = 2
    bb = _round_up(-(-b_al // n_blocks), LANES)
    b_pad = _round_up(b_al, bb)
    return bb, b_pad


def prepare_params(params):
    """One-time re-layout of (w1,b1,w2,b2,w3,b3) for the transposed kernel.

    Weights are expected as (in_features, out_features) (i.e. W^T of PyTorch);
    biases may be (n,), (1, n) or (n, 1).  Call once and reuse the result.
    """
    w1, b1, w2, b2, w3, b3 = params
    f32 = jnp.float32
    w1t = jnp.asarray(w1, f32).T                 # (hidden, in_dim)
    w2t = jnp.asarray(w2, f32).T                 # (hidden, hidden)
    w3t = jnp.asarray(w3, f32).T                 # (out_dim, hidden)
    b1c = jnp.reshape(jnp.asarray(b1, f32), (-1, 1))   # (hidden, 1)
    b2c = jnp.reshape(jnp.asarray(b2, f32), (-1, 1))   # (hidden, 1)
    b3c = jnp.reshape(jnp.asarray(b3, f32), (-1, 1))   # (out_dim, 1)
    return (w1t, b1c, w2t, b2c, w3t, b3c)


def dqn_kernel(x_ref, w1_ref, b1_ref, w2_ref, b2_ref, w3_ref, b3_ref, o_ref):
    x = x_ref[...]                               # (in_dim, bb)  batch on lanes
    w1 = w1_ref[...]                             # (H, in_dim)
    b1 = b1_ref[...]                             # (H, 1)

    if w1.shape[1] == 1:
        # Layer 1, K=1 contraction: VPU broadcast outer product, no MXU trip.
        h1 = w1 * x + b1                         # (H,1)*(1,bb)+(H,1) -> (H,bb)
    else:
        h1 = jnp.dot(w1, x, preferred_element_type=jnp.float32) + b1
    h1 = jnp.maximum(h1, 0.0)                    # (H, bb)

    # Layer 2: MXU matmul, M=K=32, N=bb (lane dimension fully utilized).
    h2 = jnp.dot(w2_ref[...], h1, preferred_element_type=jnp.float32) + b2_ref[...]
    h2 = jnp.maximum(h2, 0.0)                    # (H, bb)

    # Layer 3: (out_dim, 32) @ (32, bb); output stays lane-dense in batch.
    out = jnp.dot(w3_ref[...], h2, preferred_element_type=jnp.float32) + b3_ref[...]
    o_ref[...] = out.astype(o_ref.dtype)         # (out_dim, bb)


def dqn_forward(x, prepared, *, max_block_b=8192):
    """Fused forward pass. x: (batch, in_dim) f32. Returns (batch, out_dim)."""
    w1t, b1c, w2t, b2c, w3t, b3c = prepared
    hidden, in_dim = w1t.shape
    out_dim = w3t.shape[0]
    batch = x.shape[0]
    assert x.shape[1] == in_dim, "input feature dim mismatch"

    bb, b_pad = _choose_block(batch, max_block_b)
    grid = (b_pad // bb,)

    # Batch onto the lane axis; zero-pad to a multiple of the lane block.
    xT = jnp.asarray(x, jnp.float32).T           # (in_dim, batch)
    if b_pad != batch:
        xT = jnp.pad(xT, ((0, 0), (0, b_pad - batch)))

    flops = 2 * b_pad * (in_dim * hidden + hidden * hidden + hidden * out_dim)
    param_elems = (w1t.size + b1c.size + w2t.size + b2c.size
                   + w3t.size + b3c.size)
    bytes_accessed = 4 * (b_pad * in_dim + b_pad * out_dim + param_elems)

    const = lambda i: (0, 0)                     # params stay VMEM-resident
    outT = pl.pallas_call(
        dqn_kernel,
        out_shape=jax.ShapeDtypeStruct((out_dim, b_pad), jnp.float32),
        grid=grid,
        in_specs=[
            pl.BlockSpec((in_dim, bb), lambda i: (0, i)),   # x: lane-tiled batch
            pl.BlockSpec((hidden, in_dim), const),          # w1^T
            pl.BlockSpec((hidden, 1), const),               # b1 column
            pl.BlockSpec((hidden, hidden), const),          # w2^T
            pl.BlockSpec((hidden, 1), const),               # b2 column
            pl.BlockSpec((out_dim, hidden), const),         # w3^T
            pl.BlockSpec((out_dim, 1), const),              # b3 column
        ],
        out_specs=pl.BlockSpec((out_dim, bb), lambda i: (0, i)),
        compiler_params=pltpu.CompilerParams(
            dimension_semantics=("parallel",)),
        cost_estimate=pl.CostEstimate(
            flops=flops, transcendentals=0, bytes_accessed=bytes_accessed),
    )(xT, w1t, b1c, w2t, b2c, w3t, b3c)

    # Only out_dim * batch useful values exist; slice padding and un-transpose.
    return outT[:, :batch].T


def init_params(key, input_dim=1, hidden=HIDDEN, output_dim=2):
    """PyTorch-default-style init: U[-1/sqrt(fan_in), 1/sqrt(fan_in)].
    Weights stored as (in, out) == W^T of PyTorch's (out, in)."""
    keys = jax.random.split(key, 6)

    def linear(kw, kb, fan_in, fan_out):
        bound = 1.0 / math.sqrt(fan_in)
        w = jax.random.uniform(kw, (fan_in, fan_out), jnp.float32, -bound, bound)
        b = jax.random.uniform(kb, (fan_out,), jnp.float32, -bound, bound)
        return w, b

    w1, b1 = linear(keys[0], keys[1], input_dim, hidden)
    w2, b2 = linear(keys[2], keys[3], hidden, hidden)
    w3, b3 = linear(keys[4], keys[5], hidden, output_dim)
    return (w1, b1, w2, b2, w3, b3)


def reference_forward(x, params):
    w1, b1, w2, b2, w3, b3 = params
    h1 = jnp.maximum(x @ w1 + b1, 0.0)
    h2 = jnp.maximum(h1 @ w2 + b2, 0.0)
    return h2 @ w3 + b3


if __name__ == "__main__":
    key = jax.random.PRNGKey(0)
    k_params, k_x = jax.random.split(key)

    input_dim, output_dim = 1, 2
    params = init_params(k_params, input_dim=input_dim, output_dim=output_dim)
    prepared = prepare_params(params)            # hoisted: packed once, reused

    fwd = jax.jit(dqn_forward)

    # Small batch (single grid step).
    x = jax.random.uniform(k_x, (8, input_dim), jnp.float32, 0.0, 21.0)
    out = jax.block_until_ready(fwd(x, prepared))
    ref = reference_forward(x, params)
    assert out.shape == (8, output_dim)
    assert jnp.allclose(out, ref, atol=1e-4, rtol=1e-4), "mismatch vs reference"

    # Ragged batch (exercises lane padding).
    x2 = jax.random.uniform(jax.random.PRNGKey(1), (13, input_dim),
                            jnp.float32, 0.0, 21.0)
    out2 = jax.block_until_ready(fwd(x2, prepared))
    ref2 = reference_forward(x2, params)
    assert out2.shape == (13, output_dim)
    assert jnp.allclose(out2, ref2, atol=1e-4, rtol=1e-4), "mismatch (ragged)"

    # Larger batch (exercises the >=2-block parallel grid / megacore split).
    x3 = jax.random.uniform(jax.random.PRNGKey(2), (2304, input_dim),
                            jnp.float32, 0.0, 21.0)
    out3 = jax.block_until_ready(fwd(x3, prepared))
    ref3 = reference_forward(x3, params)
    assert out3.shape == (2304, output_dim)
    assert jnp.allclose(out3, ref3, atol=1e-4, rtol=1e-4), "mismatch (multi-block)"

    print("KERNEL_OK")
</pallas_src>

<mosaic_0001>
module attributes {stable_mosaic.version = 11 : i64} {
  func.func @dqn_kernel(%arg0: i32, %arg1: memref<1x128xf32, #tpu.memory_space<vmem>>, %arg2: memref<32x1xf32, #tpu.memory_space<vmem>>, %arg3: memref<32x1xf32, #tpu.memory_space<vmem>>, %arg4: memref<32x32xf32, #tpu.memory_space<vmem>>, %arg5: memref<32x1xf32, #tpu.memory_space<vmem>>, %arg6: memref<2x32xf32, #tpu.memory_space<vmem>>, %arg7: memref<2x1xf32, #tpu.memory_space<vmem>>, %arg8: memref<2x128xf32, #tpu.memory_space<vmem>>) attributes {dimension_semantics = [#tpu.dimension_semantics<parallel>], iteration_bounds = array<i64: 1>, scalar_prefetch = 0 : i64, scratch_operands = 0 : i64, tpu.core_type = #tpu.core_type<tc>, window_params = [{transform_indices = @transform_0, window_bounds = array<i64: 1, 128>}, {pipeline_mode = #tpu.pipeline_mode<synchronous>, transform_indices = @transform_1, window_bounds = array<i64: 32, 1>}, {pipeline_mode = #tpu.pipeline_mode<synchronous>, transform_indices = @transform_2, window_bounds = array<i64: 32, 1>}, {pipeline_mode = #tpu.pipeline_mode<synchronous>, transform_indices = @transform_3, window_bounds = array<i64: 32, 32>}, {pipeline_mode = #tpu.pipeline_mode<synchronous>, transform_indices = @transform_4, window_bounds = array<i64: 32, 1>}, {pipeline_mode = #tpu.pipeline_mode<synchronous>, transform_indices = @transform_5, window_bounds = array<i64: 2, 32>}, {pipeline_mode = #tpu.pipeline_mode<synchronous>, transform_indices = @transform_6, window_bounds = array<i64: 2, 1>}, {transform_indices = @transform_7, window_bounds = array<i64: 2, 128>}]} {
    %c0 = arith.constant 0 : index
    %c0_0 = arith.constant 0 : index
    %0 = vector.load %arg1[%c0, %c0_0] : memref<1x128xf32, #tpu.memory_space<vmem>>, vector<1x128xf32>
    %c0_1 = arith.constant 0 : index
    %c0_2 = arith.constant 0 : index
    %1 = vector.load %arg2[%c0_1, %c0_2] : memref<32x1xf32, #tpu.memory_space<vmem>>, vector<32x1xf32>
    %c0_3 = arith.constant 0 : index
    %c0_4 = arith.constant 0 : index
    %2 = vector.load %arg3[%c0_3, %c0_4] : memref<32x1xf32, #tpu.memory_space<vmem>>, vector<32x1xf32>
    %3 = vector.broadcast %1 : vector<32x1xf32> to vector<32x128xf32>
    %4 = vector.broadcast %0 : vector<1x128xf32> to vector<32x128xf32>
    %5 = arith.mulf %3, %4 : vector<32x128xf32>
    %6 = vector.broadcast %2 : vector<32x1xf32> to vector<32x128xf32>
    %7 = arith.addf %5, %6 : vector<32x128xf32>
    %cst = arith.constant 0.000000e+00 : f32
    %8 = vector.broadcast %cst : f32 to vector<32x128xf32>
    %9 = arith.maximumf %7, %8 : vector<32x128xf32>
    %c0_5 = arith.constant 0 : index
    %c0_6 = arith.constant 0 : index
    %10 = vector.load %arg4[%c0_5, %c0_6] : memref<32x32xf32, #tpu.memory_space<vmem>>, vector<32x32xf32>
    %cst_7 = arith.constant dense<0.000000e+00> : vector<32x128xf32>
    %11 = tpu.matmul %10, %9, %cst_7 {dimension_numbers = #tpu.dot_dimension_numbers<[1], [0], [0], [1], [0, 0, 1, 1], [], []>} : vector<32x32xf32>, vector<32x128xf32>, vector<32x128xf32> -> vector<32x128xf32>
    %c0_8 = arith.constant 0 : index
    %c0_9 = arith.constant 0 : index
    %12 = vector.load %arg5[%c0_8, %c0_9] : memref<32x1xf32, #tpu.memory_space<vmem>>, vector<32x1xf32>
    %13 = vector.broadcast %12 : vector<32x1xf32> to vector<32x128xf32>
    %14 = arith.addf %11, %13 : vector<32x128xf32>
    %cst_10 = arith.constant 0.000000e+00 : f32
    %15 = vector.broadcast %cst_10 : f32 to vector<32x128xf32>
    %16 = arith.maximumf %14, %15 : vector<32x128xf32>
    %c0_11 = arith.constant 0 : index
    %c0_12 = arith.constant 0 : index
    %17 = vector.load %arg6[%c0_11, %c0_12] : memref<2x32xf32, #tpu.memory_space<vmem>>, vector<2x32xf32>
    %cst_13 = arith.constant dense<0.000000e+00> : vector<2x128xf32>
    %18 = tpu.matmul %17, %16, %cst_13 {dimension_numbers = #tpu.dot_dimension_numbers<[1], [0], [0], [1], [0, 0, 1, 1], [], []>} : vector<2x32xf32>, vector<32x128xf32>, vector<2x128xf32> -> vector<2x128xf32>
    %c0_14 = arith.constant 0 : index
    %c0_15 = arith.constant 0 : index
    %19 = vector.load %arg7[%c0_14, %c0_15] : memref<2x1xf32, #tpu.memory_space<vmem>>, vector<2x1xf32>
    %20 = vector.broadcast %19 : vector<2x1xf32> to vector<2x128xf32>
    %21 = arith.addf %18, %20 : vector<2x128xf32>
    %c0_16 = arith.constant 0 : index
    %c0_17 = arith.constant 0 : index
    %22 = vector.load %arg8[%c0_16, %c0_17] : memref<2x128xf32, #tpu.memory_space<vmem>>, vector<2x128xf32>
    tpu.vector_store %arg8[%c0_16, %c0_17], %21 {strides = array<i32>} : memref<2x128xf32, #tpu.memory_space<vmem>>, vector<2x128xf32>,
    return
  }
  func.func @transform_0(%arg0: i32) -> (i32, i32) {
    %c0_i32 = arith.constant 0 : i32
    %c0_i32_0 = arith.constant 0 : i32
    return %c0_i32, %arg0 : i32, i32
  }
  func.func @transform_1(%arg0: i32) -> (i32, i32) {
    %c0_i32 = arith.constant 0 : i32
    %c0_i32_0 = arith.constant 0 : i32
    %c0_i32_1 = arith.constant 0 : i32
    return %c0_i32, %c0_i32_0 : i32, i32
  }
  func.func @transform_2(%arg0: i32) -> (i32, i32) {
    %c0_i32 = arith.constant 0 : i32
    %c0_i32_0 = arith.constant 0 : i32
    %c0_i32_1 = arith.constant 0 : i32
    return %c0_i32, %c0_i32_0 : i32, i32
  }
  func.func @transform_3(%arg0: i32) -> (i32, i32) {
    %c0_i32 = arith.constant 0 : i32
    %c0_i32_0 = arith.constant 0 : i32
    %c0_i32_1 = arith.constant 0 : i32
    return %c0_i32, %c0_i32_0 : i32, i32
  }
  func.func @transform_4(%arg0: i32) -> (i32, i32) {
    %c0_i32 = arith.constant 0 : i32
    %c0_i32_0 = arith.constant 0 : i32
    %c0_i32_1 = arith.constant 0 : i32
    return %c0_i32, %c0_i32_0 : i32, i32
  }
  func.func @transform_5(%arg0: i32) -> (i32, i32) {
    %c0_i32 = arith.constant 0 : i32
    %c0_i32_0 = arith.constant 0 : i32
    %c0_i32_1 = arith.constant 0 : i32
    return %c0_i32, %c0_i32_0 : i32, i32
  }
  func.func @transform_6(%arg0: i32) -> (i32, i32) {
    %c0_i32 = arith.constant 0 : i32
    %c0_i32_0 = arith.constant 0 : i32
    %c0_i32_1 = arith.constant 0 : i32
    return %c0_i32, %c0_i32_0 : i32, i32
  }
  func.func @transform_7(%arg0: i32) -> (i32, i32) {
    %c0_i32 = arith.constant 0 : i32
    %c0_i32_0 = arith.constant 0 : i32
    return %c0_i32, %arg0 : i32, i32
  }
}

</mosaic_0001>

<llo_original>
// kernel: dqn_forward.1
$region0: #{dqn_forward.1}
  #allocation0 [shape = 'u32[]', space=smem, size = 0x4, offset = 0x4, fixed_abs, tag = 'smem constant byte address 0x4 - core index']
  #allocation1 [shape = 'u32[72,128]{1,0:T(1,128)}', space=vmem, size = 0x9000, scoped, tag = 'internal scratch']
  %s0 = inlined_call_operand.vmem [shape: f32[1,128], index: 0, kind: input, shape index: {}]
  %s1 = inlined_call_operand.vmem [shape: f32[32,1], index: 1, kind: input, shape index: {}]
  %s2 = inlined_call_operand.vmem [shape: f32[32,1], index: 2, kind: input, shape index: {}]
  %s3 = inlined_call_operand.vmem [shape: f32[32,32], index: 3, kind: input, shape index: {}]
  %s4 = inlined_call_operand.vmem [shape: f32[32,1], index: 4, kind: input, shape index: {}]
  %s5 = inlined_call_operand.vmem [shape: f32[2,32], index: 5, kind: input, shape index: {}]
  %s6 = inlined_call_operand.vmem [shape: f32[2,1], index: 6, kind: input, shape index: {}]
  %s7 = inlined_call_operand.vmem [shape: f32[2,128], index: 7, kind: output, shape index: {}]
  %s8 = sld [smem:[#allocation0]]
  $region38: #{dqn_forward.1} parent=0
    _
  %s10 = ssub.s32 1, %s8
  %s11 = scalar_select 0, %s10, %s8
  // Predicated region
  $region2: #{dqn_forward.1} parent=0 // pred_check
    _
  $region3: #{dqn_forward.1} parent=0 // pred_check_branch
    %13 = sbr.rel (0) target = $region5
  $region4: #{dqn_forward.1} parent=0 // pred_region
    _
  $region5: #{dqn_forward.1} parent=0 // pred_fallthru
    _
  // Predicated region
  $region6: #{dqn_forward.1} parent=0 // pred_check
    _
  $region7: #{dqn_forward.1} parent=0 // pred_check_branch
    %15 = sbr.rel (0) target = $region9
  $region8: #{dqn_forward.1} parent=0 // pred_region
    _
  $region9: #{dqn_forward.1} parent=0 // pred_fallthru
    _
  // Predicated region
  $region10: #{dqn_forward.1} parent=0 // pred_check
    _
  $region11: #{dqn_forward.1} parent=0 // pred_check_branch
    %17 = sbr.rel (0) target = $region13
  $region12: #{dqn_forward.1} parent=0 // pred_region
    _
  $region13: #{dqn_forward.1} parent=0 // pred_fallthru
    _
  // Predicated region
  $region14: #{dqn_forward.1} parent=0 // pred_check
    _
  $region15: #{dqn_forward.1} parent=0 // pred_check_branch
    %19 = sbr.rel (0) target = $region17
  $region16: #{dqn_forward.1} parent=0 // pred_region
    _
  $region17: #{dqn_forward.1} parent=0 // pred_fallthru
    _
  // Predicated region
  $region18: #{dqn_forward.1} parent=0 // pred_check
    _
  $region19: #{dqn_forward.1} parent=0 // pred_check_branch
    %21 = sbr.rel (0) target = $region21
  $region20: #{dqn_forward.1} parent=0 // pred_region
    _
  $region21: #{dqn_forward.1} parent=0 // pred_fallthru
    _
  // Predicated region
  $region22: #{dqn_forward.1} parent=0 // pred_check
    _
  $region23: #{dqn_forward.1} parent=0 // pred_check_branch
    %23 = sbr.rel (0) target = $region25
  $region24: #{dqn_forward.1} parent=0 // pred_region
    _
  $region25: #{dqn_forward.1} parent=0 // pred_fallthru
    _
  // Predicated region
  $region26: #{dqn_forward.1} parent=0 // pred_check
    _
  $region27: #{dqn_forward.1} parent=0 // pred_check_branch
    %25 = sbr.rel (0) target = $region29
  $region28: #{dqn_forward.1} parent=0 // pred_region
    _
  $region29: #{dqn_forward.1} parent=0 // pred_fallthru
    _
  %v26 = vld [vmem:[%s0] sm:$0x1]
  %v27 = vld [vmem:[%s1] sm:$0xff]
  %v28 = vld [vmem:[%s1 + $0x8] sm:$0xff]
  %v29 = vld [vmem:[%s1 + $0x10] sm:$0xff]
  %v30 = vld [vmem:[%s1 + $0x18] sm:$0xff]
  %v31 = vld [vmem:[%s2] sm:$0xff]
  %v32 = vld [vmem:[%s2 + $0x8] sm:$0xff]
  %v33 = vld [vmem:[%s2 + $0x10] sm:$0xff]
  %v34 = vld [vmem:[%s2 + $0x18] sm:$0xff]
  %36 = vset.pattern.permute.xlu0 0
  %37 = vperm.xlu0 %36, %v27
  %v38 = vpop.permute.xlu0 %37
  %41 = vset.pattern.permute.xlu0 0
  %42 = vperm.xlu0 %41, %v28
  %v43 = vpop.permute.xlu0 %42
  %46 = vset.pattern.permute.xlu0 0
  %47 = vperm.xlu0 %46, %v29
  %v48 = vpop.permute.xlu0 %47
  %51 = vset.pattern.permute.xlu0 0
  %52 = vperm.xlu0 %51, %v30
  %v53 = vpop.permute.xlu0 %52
  %v56 = vperm.slane %v26, 0
  %v58 = vmul.f32 %v38, %v56
  %v59 = vmul.f32 %v43, %v56
  %v60 = vmul.f32 %v48, %v56
  %v61 = vmul.f32 %v53, %v56
  %63 = vset.pattern.permute.xlu0 0
  %64 = vperm.xlu0 %63, %v31
  %v65 = vpop.permute.xlu0 %64
  %68 = vset.pattern.permute.xlu0 0
  %69 = vperm.xlu0 %68, %v32
  %v70 = vpop.permute.xlu0 %69
  %73 = vset.pattern.permute.xlu0 0
  %74 = vperm.xlu0 %73, %v33
  %v75 = vpop.permute.xlu0 %74
  %78 = vset.pattern.permute.xlu0 0
  %79 = vperm.xlu0 %78, %v34
  %v80 = vpop.permute.xlu0 %79
  %v82 = vadd.f32 %v58, %v65
  %v83 = vadd.f32 %v59, %v70
  %v84 = vadd.f32 %v60, %v75
  %v85 = vadd.f32 %v61, %v80
  %v86 = vmax.f32 %v82, 0.0
  %v87 = vmax.f32 %v83, 0.0
  %v88 = vmax.f32 %v84, 0.0
  %v89 = vmax.f32 %v85, 0.0
  %v90 = vld [vmem:[%s3] sm:$0xff]
  %v91 = vld [vmem:[%s3 + $0x8] sm:$0xff]
  %v92 = vld [vmem:[%s3 + $0x10] sm:$0xff]
  %v93 = vld [vmem:[%s3 + $0x18] sm:$0xff]
  %v94 = vld [vmem:[%s4] sm:$0xff]
  %v95 = vld [vmem:[%s4 + $0x8] sm:$0xff]
  %v96 = vld [vmem:[%s4 + $0x10] sm:$0xff]
  %v97 = vld [vmem:[%s4 + $0x18] sm:$0xff]
  %99 = vset.pattern.permute.xlu0 0
  %100 = vperm.xlu0 %99, %v94
  %v101 = vpop.permute.xlu0 %100
  %104 = vset.pattern.permute.xlu0 0
  %105 = vperm.xlu0 %104, %v95
  %v106 = vpop.permute.xlu0 %105
  %109 = vset.pattern.permute.xlu0 0
  %110 = vperm.xlu0 %109, %v96
  %v111 = vpop.permute.xlu0 %110
  %114 = vset.pattern.permute.xlu0 0
  %115 = vperm.xlu0 %114, %v97
  %v116 = vpop.permute.xlu0 %115
  %vm118 = vcmask 261120
  %v120 = vsel %vm118, %v90, 0
  %v123 = vsel %vm118, %v91, 0
  %v126 = vsel %vm118, %v92, 0
  %v129 = vsel %vm118, %v93, 0
  %131 = vmatpush.msra.mxu0 0.0
  %132 = vmatpush.msra.mxu0 0.0
  %133 = vmatpush.msra.mxu0 0.0
  %134 = vmatpush.msra.mxu0 0.0
  %135 = vmatpush.msra.mxu0 0.0
  %136 = vmatpush.msra.mxu0 0.0
  %137 = vmatpush.msra.mxu0 0.0
  %138 = vmatpush.msra.mxu0 0.0
  %139 = vmatpush.msra.mxu0 0.0
  %140 = vmatpush.msra.mxu0 0.0
  %141 = vmatpush.msra.mxu0 0.0
  %142 = vmatpush.msra.mxu0 0.0
  %143 = vmatpush.msra.mxu0 %v89
  %144 = vmatpush.msra.mxu0 %v88
  %145 = vmatpush.msra.mxu0 %v87
  %146 = vmatpush.msra.mxu0 %v86
  %147 = vmatmul.f32.gmra.mxu0 %v120
  %v148 = vpop.f32.mrf.mxu0
  %v149 = vadd.f32 %v101, %v148
  %150 = vmatmul.f32.gmra.mxu0 %v123
  %v151 = vpop.f32.mrf.mxu0
  %v152 = vadd.f32 %v106, %v151
  %153 = vmatmul.f32.gmra.mxu0 %v126
  %v154 = vpop.f32.mrf.mxu0
  %v155 = vadd.f32 %v111, %v154
  %156 = vmatmul.f32.gmra.mxu0 %v129
  %v157 = vpop.f32.mrf.mxu0
  %v158 = vadd.f32 %v116, %v157
  %159 = vdwg.mxu0
  %v160 = vmax.f32 %v149, 0.0
  %v161 = vmax.f32 %v152, 0.0
  %v162 = vmax.f32 %v155, 0.0
  %v163 = vmax.f32 %v158, 0.0
  %v164 = vld [vmem:[%s5] sm:$0x3]
  %v165 = vld [vmem:[%s6] sm:$0x3]
  %167 = vset.pattern.permute.xlu0 0
  %168 = vperm.xlu0 %167, %v165
  %v169 = vpop.permute.xlu0 %168
  %v172 = vsel %vm118, %v164, 0
  %174 = vmatpush.msra.mxu0 0.0
  %175 = vmatpush.msra.mxu0 0.0
  %176 = vmatpush.msra.mxu0 0.0
  %177 = vmatpush.msra.mxu0 0.0
  %178 = vmatpush.msra.mxu0 0.0
  %179 = vmatpush.msra.mxu0 0.0
  %180 = vmatpush.msra.mxu0 0.0
  %181 = vmatpush.msra.mxu0 0.0
  %182 = vmatpush.msra.mxu0 0.0
  %183 = vmatpush.msra.mxu0 0.0
  %184 = vmatpush.msra.mxu0 0.0
  %185 = vmatpush.msra.mxu0 0.0
  %186 = vmatpush.msra.mxu0 %v163
  %187 = vmatpush.msra.mxu0 %v162
  %188 = vmatpush.msra.mxu0 %v161
  %189 = vmatpush.msra.mxu0 %v160
  %190 = vmatmul.f32.gmra.mxu0 %v172
  %v191 = vpop.f32.mrf.mxu0
  %v192 = vadd.f32 %v169, %v191
  %193 = vdwg.mxu0
  %194 = vst [vmem:[%s7] sm:$0x3] %v192
  // Predicated region
  $region30: #{dqn_forward.1} parent=0 // pred_check
    _
  $region31: #{dqn_forward.1} parent=0 // pred_check_branch
    %196 = sbr.rel (0) target = $region33
  $region32: #{dqn_forward.1} parent=0 // pred_region
    _
  $region33: #{dqn_forward.1} parent=0 // pred_fallthru
    _
  // Predicated region
  $region34: #{dqn_forward.1} parent=0 // pred_check
    _
  $region35: #{dqn_forward.1} parent=0 // pred_check_branch
    %198 = sbr.rel (0) target = $region37
  $region36: #{dqn_forward.1} parent=0 // pred_region
    _
  $region37: #{dqn_forward.1} parent=0 // pred_fallthru
    _

</llo_original>
